<compile_context>
chip_gen: v7x
topology: tpu7x:2x2x1
jax: 0.10.0
libtpu: 0.0.40
codegen_flags: <defaults>
</compile_context>

<pallas_src>
import math
import functools

import jax
import jax.numpy as jnp
from jax.experimental import pallas as pl
from jax.experimental.pallas import tpu as pltpu


N_PAD = 128          # lane-dense class dimension; real classes live in [:num_classes]


def _round_up(a: int, m: int) -> int:
    return (a + m - 1) // m * m


# ----------------------------------------------------------------------------
# Pallas kernel: fused (folded, window-reduced) victim linear + softmax
# ----------------------------------------------------------------------------
def _reprogram_kernel(x_ref, w_ref, b_ref, out_ref):
    # bf16 operands, f32 MXU accumulation.
    logits = jnp.dot(x_ref[...], w_ref[...],
                     preferred_element_type=jnp.float32) + b_ref[...]
    # Padded class columns carry a -1e30 bias, so exp() underflows to exactly 0
    # and the softmax runs over the real victim classes only.
    m = jnp.max(logits, axis=1, keepdims=True)
    e = jnp.exp(logits - m)
    denom = jnp.sum(e, axis=1, keepdims=True)
    # f32 softmax math, bf16 store (halves the dominant output HBM stream).
    out_ref[...] = (e * pl.reciprocal(denom, approx=True)).astype(out_ref.dtype)


def reprogram_forward(x_red, w_red, b_eff, *, tb_max=1024):
    """x_red: (B, K_pad) bf16, w_red: (K_pad, N_PAD) bf16, b_eff: (1, N_PAD) f32."""
    B, K = x_red.shape
    _, n_pad = w_red.shape

    # Batch tile: multiple of 16 (bf16 sublane tile), as large as possible up to
    # tb_max; prefer >= 2 tiles when the batch allows so the "parallel" axis can
    # shard across v7x's two TensorCores (harmless single-TC on v5e/v6e).
    b16 = _round_up(max(B, 1), 16)
    tb = min(b16, tb_max)
    if tb == b16 and b16 >= 32:
        tb = _round_up(b16 // 2, 16)
    b_pad = _round_up(b16, tb)
    if b_pad != B:
        x_red = jnp.pad(x_red, ((0, b_pad - B), (0, 0)))

    grid_spec = pl.GridSpec(
        grid=(b_pad // tb,),
        in_specs=[
            pl.BlockSpec((tb, K), lambda i: (i, 0)),      # bf16 activations, batch-tiled
            pl.BlockSpec((K, n_pad), lambda i: (0, 0)),   # reduced folded weight (tiny, VMEM-resident)
            pl.BlockSpec((1, n_pad), lambda i: (0, 0)),   # folded bias (VMEM-resident)
        ],
        out_specs=pl.BlockSpec((tb, n_pad), lambda i: (i, 0)),
    )
    return pl.pallas_call(
        _reprogram_kernel,
        out_shape=jax.ShapeDtypeStruct((b_pad, n_pad), jnp.bfloat16),
        grid_spec=grid_spec,
        compiler_params=pltpu.CompilerParams(
            dimension_semantics=("parallel",),   # independent batch tiles (megacore)
            vmem_limit_bytes=32 << 20),          # headroom for large tb on v5e's 16 MiB default
    )(x_red, w_red, b_eff)


# ----------------------------------------------------------------------------
# Module-equivalent glue (mask / adapter_fn / folding / output_mapper)
# ----------------------------------------------------------------------------
def get_mask(attack_dims, victim_dims):
    # Exactly mirrors MNISTReprogram._get_mask (including its centering quirk).
    _, in_h, in_w = attack_dims
    w_center = math.ceil(in_w / 2)
    h_center = math.ceil(in_h / 2)
    w_start = w_center - in_w // 2
    w_end = w_start + in_w
    h_start = h_center - in_h // 2
    h_end = h_start + in_h
    M = jnp.ones(victim_dims, dtype=jnp.float32)
    M = M.at[:, h_start:h_end, w_start:w_end].set(0.0)
    return M


def adapter_fn(x, attack_dims, victim_dims):
    # Mirrors MNISTReprogram.adapter_fn (used only by the pure-JAX reference).
    B = x.shape[0]
    X = jnp.zeros((B, *victim_dims), dtype=jnp.float32)
    start_x = victim_dims[1] // 2 - attack_dims[1] // 2
    start_y = victim_dims[2] // 2 - attack_dims[2] // 2
    x_exp = jnp.broadcast_to(
        x, (B, victim_dims[0], attack_dims[1], attack_dims[2]))
    return jax.lax.dynamic_update_slice(X, x_exp, (0, 0, start_x, start_y))


class MNISTReprogramPallas:
    # TODO(synk): the frozen victim `network` is an injected nn.Module in
    # PyTorch; only a linear (flatten -> Linear) victim classifier is
    # implemented here.  Conv victims would need their own kernels.
    def __init__(self, attack_dims, victim_dims, num_classes, key):
        assert victim_dims[0] == 3, "normalization assumes 3 channels"
        assert 10 <= num_classes <= N_PAD
        c_att, h_att, w_att = attack_dims
        C, H, Wd = victim_dims
        assert c_att in (1, C), "adapter channel expand requires c_att in {1, C}"
        self.attack_dims = attack_dims
        self.victim_dims = victim_dims
        self.num_classes = num_classes
        self.D = D = C * H * Wd

        kW, kNW, kNB = jax.random.split(key, 3)
        # trainable program parameter  W ~ N(0, 1)   (torch.randn(victim_dims))
        self.W = jax.random.normal(kW, victim_dims, dtype=jnp.float32)
        self.mask = get_mask(attack_dims, victim_dims)

        # frozen victim network: deterministic linear classifier on the flat image
        self.net_w = (jax.random.normal(kNW, (D, num_classes), jnp.float32)
                      / jnp.sqrt(jnp.float32(D)))
        self.net_b = jax.random.normal(kNB, (num_classes,), jnp.float32) * 0.1

        # ImageNet normalization constants, broadcast to per-pixel vectors
        mean = jnp.array([0.485, 0.456, 0.406], jnp.float32).reshape(-1, 1, 1)
        std = jnp.array([0.229, 0.224, 0.225], jnp.float32).reshape(-1, 1, 1)
        self.mean_flat = jnp.broadcast_to(mean, victim_dims).reshape(1, D)
        self.inv_std_flat = (1.0 / jnp.broadcast_to(std, victim_dims)).reshape(1, D)

        self.w_flat = self.W.reshape(1, D)
        self.mask_flat = self.mask.reshape(1, D)

        # Lane-dense (128-wide) padded victim classifier.  Padded weight columns
        # are zero; padded bias columns are -1e30 so exp() kills them in softmax.
        n_extra = N_PAD - num_classes
        self.net_w_pad = jnp.pad(self.net_w, ((0, 0), (0, n_extra)))
        self.net_b_pad = jnp.concatenate(
            [self.net_b, jnp.full((n_extra,), -1e30, jnp.float32)]).reshape(1, N_PAD)

        # ---- hoisted folds (independent of the trainable W) ------------------
        # Normalization folded into the classifier weight (f32, used by b_eff).
        self.w_eff_full = self.net_w_pad * self.inv_std_flat.reshape(D, 1)   # (D, 128)

        # Zero-skip: reduce W_eff to the attack window only, summing over victim
        # channels when the attack image is single-channel (adapter's expand).
        start_h = H // 2 - h_att // 2
        start_w = Wd // 2 - w_att // 2
        w_eff_img = self.w_eff_full.reshape(C, H, Wd, N_PAD)
        w_win = w_eff_img[:, start_h:start_h + h_att, start_w:start_w + w_att, :]
        if c_att == 1:
            w_red = w_win.sum(axis=0).reshape(h_att * w_att, N_PAD)
        else:
            w_red = w_win.reshape(C * h_att * w_att, N_PAD)
        self.K_red = w_red.shape[0]
        self.K_pad = _round_up(self.K_red, 128)          # lane-dense contraction dim
        self.w_red_bf16 = jnp.pad(
            w_red, ((0, self.K_pad - self.K_red), (0, 0))).astype(jnp.bfloat16)

    @functools.partial(jax.jit, static_argnums=0)
    def __call__(self, x):
        B = x.shape[0]

        # Per-call fold of the trainable program into the bias (one small matvec):
        #   ((X + P - mean) * inv_std) @ Wn + bn
        # = X @ W_eff  +  ((P - mean) * inv_std) @ Wn + bn
        p = jax.nn.sigmoid(self.w_flat * self.mask_flat)                    # (1, D)
        b_eff = (p - self.mean_flat) @ self.w_eff_full + self.net_b_pad     # (1, 128)

        # Zero-skip activations: only the attack window is nonzero in X, so feed
        # the kernel x flattened over the window (channel expand handled by the
        # channel-summed W_red).  Cast to bf16 here -> halves the x DMA bytes.
        x_red = x.reshape(B, -1)                                            # (B, K_red)
        x_red = jnp.pad(x_red, ((0, 0), (0, self.K_pad - self.K_red)))
        x_red = x_red.astype(jnp.bfloat16)

        probs = reprogram_forward(x_red, self.w_red_bf16, b_eff)
        return probs[:B, :10].astype(jnp.float32)                           # output_mapper

    # pure-JAX f32 reference for verification
    def reference(self, x):
        X = adapter_fn(x, self.attack_dims, self.victim_dims)
        P = jax.nn.sigmoid(self.W * self.mask)
        X_adv = X + P[None]
        mean = jnp.array([0.485, 0.456, 0.406], jnp.float32).reshape(-1, 1, 1)
        std = jnp.array([0.229, 0.224, 0.225], jnp.float32).reshape(-1, 1, 1)
        X_adv = (X_adv - mean) / std
        logits = X_adv.reshape(X.shape[0], -1) @ self.net_w + self.net_b
        return jax.nn.softmax(logits, axis=1)[:, :10]


if __name__ == "__main__":
    # small shapes consistent with the module:
    #   attack image: 1x8x8 (grayscale, MNIST-like), victim input: 3x16x16
    attack_dims = (1, 8, 8)
    victim_dims = (3, 16, 16)
    num_classes = 16        # victim label space (>= 10 so output_mapper works)
    batch = 4

    key = jax.random.PRNGKey(0)
    k_in, k_mod = jax.random.split(key)
    x = jax.random.uniform(k_in, (batch, *attack_dims), dtype=jnp.float32)

    model = MNISTReprogramPallas(attack_dims, victim_dims, num_classes, k_mod)

    out = jax.block_until_ready(model(x))
    ref = model.reference(x)

    assert out.shape == (batch, 10)
    # bf16 MXU operands + bf16 output store + approx EUP reciprocal
    # => relaxed tolerance vs the f32 reference
    assert jnp.allclose(out, ref, atol=1e-2, rtol=1e-2), (out, ref)

    print("KERNEL_OK")
</pallas_src>

<mosaic_0001>
module attributes {stable_mosaic.version = 11 : i64} {
  func.func @_reprogram_kernel(%arg0: i32, %arg1: memref<16x128xbf16, #tpu.memory_space<vmem>>, %arg2: memref<128x128xbf16, #tpu.memory_space<vmem>>, %arg3: memref<1x128xf32, #tpu.memory_space<vmem>>, %arg4: memref<16x128xbf16, #tpu.memory_space<vmem>>) attributes {dimension_semantics = [#tpu.dimension_semantics<parallel>], iteration_bounds = array<i64: 1>, scalar_prefetch = 0 : i64, scratch_operands = 0 : i64, tpu.core_type = #tpu.core_type<tc>, window_params = [{transform_indices = @transform_0, window_bounds = array<i64: 16, 128>}, {pipeline_mode = #tpu.pipeline_mode<synchronous>, transform_indices = @transform_1, window_bounds = array<i64: 128, 128>}, {pipeline_mode = #tpu.pipeline_mode<synchronous>, transform_indices = @transform_2, window_bounds = array<i64: 1, 128>}, {transform_indices = @transform_3, window_bounds = array<i64: 16, 128>}]} {
    %c0 = arith.constant 0 : index
    %c0_0 = arith.constant 0 : index
    %0 = vector.load %arg1[%c0, %c0_0] : memref<16x128xbf16, #tpu.memory_space<vmem>>, vector<16x128xbf16>
    %c0_1 = arith.constant 0 : index
    %c0_2 = arith.constant 0 : index
    %1 = vector.load %arg2[%c0_1, %c0_2] : memref<128x128xbf16, #tpu.memory_space<vmem>>, vector<128x128xbf16>
    %cst = arith.constant dense<0.000000e+00> : vector<16x128xf32>
    %2 = tpu.matmul %0, %1, %cst {dimension_numbers = #tpu.dot_dimension_numbers<[1], [0], [0], [1], [0, 0, 1, 1], [], []>} : vector<16x128xbf16>, vector<128x128xbf16>, vector<16x128xf32> -> vector<16x128xf32>
    %c0_3 = arith.constant 0 : index
    %c0_4 = arith.constant 0 : index
    %3 = vector.load %arg3[%c0_3, %c0_4] : memref<1x128xf32, #tpu.memory_space<vmem>>, vector<1x128xf32>
    %4 = vector.broadcast %3 : vector<1x128xf32> to vector<16x128xf32>
    %5 = arith.addf %2, %4 : vector<16x128xf32>
    %cst_5 = arith.constant dense<0xFF800000> : vector<16xf32>
    %6 = vector.multi_reduction <maximumf>, %5, %cst_5 [1] : vector<16x128xf32> to vector<16xf32>
    %7 = vector.shape_cast %6 : vector<16xf32> to vector<16x1xf32>
    %8 = vector.broadcast %7 : vector<16x1xf32> to vector<16x128xf32>
    %9 = arith.subf %5, %8 : vector<16x128xf32>
    %10 = math.exp %9 : vector<16x128xf32>
    %cst_6 = arith.constant dense<0.000000e+00> : vector<16xf32>
    %11 = vector.multi_reduction <add>, %10, %cst_6 [1] : vector<16x128xf32> to vector<16xf32>
    %12 = vector.shape_cast %11 : vector<16xf32> to vector<16x1xf32>
    %13 = tpu.reciprocal %12 {approx = true} : vector<16x1xf32> -> vector<16x1xf32>
    %14 = vector.broadcast %13 : vector<16x1xf32> to vector<16x128xf32>
    %15 = arith.mulf %10, %14 : vector<16x128xf32>
    %16 = arith.truncf %15 : vector<16x128xf32> to vector<16x128xbf16>
    %c0_7 = arith.constant 0 : index
    %c0_8 = arith.constant 0 : index
    %17 = vector.load %arg4[%c0_7, %c0_8] : memref<16x128xbf16, #tpu.memory_space<vmem>>, vector<16x128xbf16>
    tpu.vector_store %arg4[%c0_7, %c0_8], %16 {strides = array<i32>} : memref<16x128xbf16, #tpu.memory_space<vmem>>, vector<16x128xbf16>,
    return
  }
  func.func @transform_0(%arg0: i32) -> (i32, i32) {
    %c0_i32 = arith.constant 0 : i32
    %c0_i32_0 = arith.constant 0 : i32
    return %arg0, %c0_i32 : i32, i32
  }
  func.func @transform_1(%arg0: i32) -> (i32, i32) {
    %c0_i32 = arith.constant 0 : i32
    %c0_i32_0 = arith.constant 0 : i32
    %c0_i32_1 = arith.constant 0 : i32
    return %c0_i32, %c0_i32_0 : i32, i32
  }
  func.func @transform_2(%arg0: i32) -> (i32, i32) {
    %c0_i32 = arith.constant 0 : i32
    %c0_i32_0 = arith.constant 0 : i32
    %c0_i32_1 = arith.constant 0 : i32
    return %c0_i32, %c0_i32_0 : i32, i32
  }
  func.func @transform_3(%arg0: i32) -> (i32, i32) {
    %c0_i32 = arith.constant 0 : i32
    %c0_i32_0 = arith.constant 0 : i32
    return %arg0, %c0_i32 : i32, i32
  }
}

</mosaic_0001>

<llo_original>
// kernel: a_call__.1
$region0: #{a_call__.1}
  #allocation0 [shape = 'u32[]', space=smem, size = 0x4, offset = 0x4, fixed_abs, tag = 'smem constant byte address 0x4 - core index']
  #allocation1 [shape = 'u32[144,128]{1,0:T(1,128)}', space=vmem, size = 0x12000, scoped, tag = 'internal scratch']
  %s0 = inlined_call_operand.vmem [shape: bf16[16,128], index: 0, kind: input, shape index: {}]
  %s1 = inlined_call_operand.vmem [shape: bf16[128,128], index: 1, kind: input, shape index: {}]
  %s2 = inlined_call_operand.vmem [shape: f32[1,128], index: 2, kind: input, shape index: {}]
  %s3 = inlined_call_operand.vmem [shape: bf16[16,128], index: 3, kind: output, shape index: {}]
  %s4 = sld [smem:[#allocation0]]
  $region22: #{a_call__.1} parent=0
    _
  %s6 = ssub.s32 1, %s4
  %s7 = scalar_select 0, %s6, %s4
  // Predicated region
  $region2: #{a_call__.1} parent=0 // pred_check
    _
  $region3: #{a_call__.1} parent=0 // pred_check_branch
    %9 = sbr.rel (0) target = $region5
  $region4: #{a_call__.1} parent=0 // pred_region
    _
  $region5: #{a_call__.1} parent=0 // pred_fallthru
    _
  // Predicated region
  $region6: #{a_call__.1} parent=0 // pred_check
    _
  $region7: #{a_call__.1} parent=0 // pred_check_branch
    %11 = sbr.rel (0) target = $region9
  $region8: #{a_call__.1} parent=0 // pred_region
    _
  $region9: #{a_call__.1} parent=0 // pred_fallthru
    _
  // Predicated region
  $region10: #{a_call__.1} parent=0 // pred_check
    _
  $region11: #{a_call__.1} parent=0 // pred_check_branch
    %13 = sbr.rel (0) target = $region13
  $region12: #{a_call__.1} parent=0 // pred_region
    _
  $region13: #{a_call__.1} parent=0 // pred_fallthru
    _
  %v15 = vld [vmem:[%s0] sm:$0xf]
  %v16 = vld [vmem:[%s0 + $0x4] sm:$0xf]
  %v17 = vld [vmem:[%s1] sm:$0xf]
  %v18 = vld [vmem:[%s1 + $0x4] sm:$0xf]
  %v19 = vld [vmem:[%s1 + $0x8] sm:$0xf]
  %v20 = vld [vmem:[%s1 + $0xc] sm:$0xf]
  %v21 = vld [vmem:[%s1 + $0x10] sm:$0xf]
  %v22 = vld [vmem:[%s1 + $0x14] sm:$0xf]
  %v23 = vld [vmem:[%s1 + $0x18] sm:$0xf]
  %v24 = vld [vmem:[%s1 + $0x1c] sm:$0xf]
  %v25 = vld [vmem:[%s1 + $0x20] sm:$0xf]
  %v26 = vld [vmem:[%s1 + $0x24] sm:$0xf]
  %v27 = vld [vmem:[%s1 + $0x28] sm:$0xf]
  %v28 = vld [vmem:[%s1 + $0x2c] sm:$0xf]
  %v29 = vld [vmem:[%s1 + $0x30] sm:$0xf]
  %v30 = vld [vmem:[%s1 + $0x34] sm:$0xf]
  %v31 = vld [vmem:[%s1 + $0x38] sm:$0xf]
  %v32 = vld [vmem:[%s1 + $0x3c] sm:$0xf]
  %v33 = vld [vmem:[%s2] sm:$0x1]
  %v35 = vlaneseq
  %v36 = vshrl.u32 %v35, 7
  %v37 = vsub.s32 0, %v36
  %v38 = vrot.slane %v33, %v37
  %v42 = vunpack.c.l.b16 %v15
  %v43 = vunpack.c.l.b16 %v16
  %v44 = vpack.c.b16 %v43, %v42
  %v62 = vunpack.c.l.b16 %v17
  %v63 = vunpack.c.l.b16 %v18
  %v64 = vunpack.c.l.b16 %v19
  %v65 = vunpack.c.l.b16 %v20
  %v66 = vunpack.c.l.b16 %v21
  %v67 = vunpack.c.l.b16 %v22
  %v68 = vunpack.c.l.b16 %v23
  %v69 = vunpack.c.l.b16 %v24
  %v70 = vunpack.c.l.b16 %v25
  %v71 = vunpack.c.l.b16 %v26
  %v72 = vunpack.c.l.b16 %v27
  %v73 = vunpack.c.l.b16 %v28
  %v74 = vunpack.c.l.b16 %v29
  %v75 = vunpack.c.l.b16 %v30
  %v76 = vunpack.c.l.b16 %v31
  %v77 = vunpack.c.l.b16 %v32
  %v78 = vpack.c.b16 %v63, %v62
  %v79 = vpack.c.b16 %v65, %v64
  %v80 = vpack.c.b16 %v67, %v66
  %v81 = vpack.c.b16 %v69, %v68
  %v82 = vpack.c.b16 %v71, %v70
  %v83 = vpack.c.b16 %v73, %v72
  %v84 = vpack.c.b16 %v75, %v74
  %v85 = vpack.c.b16 %v77, %v76
  %94 = vmatprep.subr.bf16.mxu0 0
  %95 = vmatpush1.bf16.msra.mxu0 %v78
  %96 = vmatprep.subr.bf16.mxu0 0
  %97 = vmatpush1.bf16.msra.mxu0 %v79
  %98 = vmatprep.subr.bf16.mxu0 0
  %99 = vmatpush1.bf16.msra.mxu0 %v80
  %100 = vmatprep.subr.bf16.mxu0 0
  %101 = vmatpush1.bf16.msra.mxu0 %v81
  %102 = vmatprep.subr.bf16.mxu0 0
  %103 = vmatpush1.bf16.msra.mxu0 %v82
  %104 = vmatprep.subr.bf16.mxu0 0
  %105 = vmatpush1.bf16.msra.mxu0 %v83
  %106 = vmatprep.subr.bf16.mxu0 0
  %107 = vmatpush1.bf16.msra.mxu0 %v84
  %108 = vmatprep.subr.bf16.mxu0 0
  %109 = vmatpush1.bf16.msra.mxu0 %v85
  %110 = vmatprep.subr.bf16.mxu0 0
  %111 = vmatpush1.bf16.msra.mxu0 0
  %112 = vmatprep.subr.bf16.mxu0 0
  %113 = vmatpush1.bf16.msra.mxu0 0
  %114 = vmatprep.subr.bf16.mxu0 0
  %115 = vmatpush1.bf16.msra.mxu0 0
  %116 = vmatprep.subr.bf16.mxu0 0
  %117 = vmatpush1.bf16.msra.mxu0 0
  %118 = vmatprep.subr.bf16.mxu0 0
  %119 = vmatpush1.bf16.msra.mxu0 0
  %120 = vmatprep.subr.bf16.mxu0 0
  %121 = vmatpush1.bf16.msra.mxu0 0
  %122 = vmatprep.subr.bf16.mxu0 0
  %123 = vmatpush1.bf16.msra.mxu0 0
  %124 = vmatprep.subr.bf16.mxu0 0
  %125 = vmatpush1.bf16.msra.mxu0 0
  %126 = vmatprep.mubr.bf16.mxu0 0
  %127 = vmatmul.mubr.bf16.gmra.mrb[0].mxu0 %v44
  %v128 = vpop.f32.mrb[0].mxu0
  %v129 = vadd.f32 %v38, %v128
  %v130 = vpop.f32.mrb[0].mxu0
  %v131 = vpop.f32.mrb[0].mxu0
  %v132 = vadd.f32 %v38, %v131
  %v133 = vpop.f32.mrb[0].mxu0
  %134 = vdwg.mxu0
  %135 = vmax.xlane.f32.xlu0 %v129
  %v136 = vpop.xlane.xlu0 %135
  %137 = vmax.xlane.f32.xlu0 %v132
  %v138 = vpop.xlane.xlu0 %137
  %v139 = vsub.f32 %v129, %v136
  %v140 = vsub.f32 %v132, %v138
  %v141 = vmul.f32 %v139, 1.442695
  %v142 = vpow.pop %v141
  %v143 = vmul.f32 %v140, 1.442695
  %v144 = vpow.pop %v143
  %145 = vadd.xlane.f32.xlu0 %v142
  %v146 = vpop.xlane.xlu0 %145
  %147 = vadd.xlane.f32.xlu0 %v144
  %v148 = vpop.xlane.xlu0 %147
  %v149 = vrcp.pop %v146
  %v150 = vrcp.pop %v148
  %v151 = vmul.f32 %v142, %v149
  %v152 = vmul.f32 %v144, %v150
  %v153 = vpack.c.bf16 %v152, %v151
  %v155 = vunpack.c.l.b16 %v153
  %v156 = vunpack.c.h.b16 %v153
  %v157 = vpack.c.b16 %v155, %v155
  %v158 = vpack.c.b16 %v156, %v156
  %161 = vst [vmem:[%s3] sm:$0xf] %v157
  %162 = vst [vmem:[%s3 + $0x4] sm:$0xf] %v158
  // Predicated region
  $region14: #{a_call__.1} parent=0 // pred_check
    _
  $region15: #{a_call__.1} parent=0 // pred_check_branch
    %164 = sbr.rel (0) target = $region17
  $region16: #{a_call__.1} parent=0 // pred_region
    _
  $region17: #{a_call__.1} parent=0 // pred_fallthru
    _
  // Predicated region
  $region18: #{a_call__.1} parent=0 // pred_check
    _
  $region19: #{a_call__.1} parent=0 // pred_check_branch
    %166 = sbr.rel (0) target = $region21
  $region20: #{a_call__.1} parent=0 // pred_region
    _
  $region21: #{a_call__.1} parent=0 // pred_fallthru
    _

</llo_original>
